<compile_context>
chip_gen: v5e
topology: v5e:2x2
jax: 0.10.0
libtpu: 0.0.40
codegen_flags: <defaults>
</compile_context>

<pallas_src>
import math
from functools import partial

import jax
import jax.numpy as jnp
from jax.experimental import pallas as pl
from jax.experimental.pallas import tpu as pltpu

LANE = 128            # lane width of a vreg
MAX_TILE_ROWS = 2048  # 2048 * 128 * 4 B = 1 MiB per operand tile


def _phys_attn_kernel(params_ref, x_ref, r_ref, out_ref, *, degree):
    """params_ref: SMEM (4,) = [r0, k_eff, c_down, r_sq_scale] (pre-folded scalars)
       x_ref     : VMEM (TILE_R, 128) raw x-feature slab
       r_ref     : VMEM (TILE_R, 128) raw r-feature slab
       out_ref   : VMEM (TILE_R, 128) interacting coefficient slab
    """
    r0 = params_ref[0]
    k_eff = params_ref[1]        # relu(k + eps) * scale_x
    c_down = params_ref[2]       # relu(alpha + eps) * r0^2
    r_sq_scale = params_ref[3]   # scale_r^2

    x = x_ref[...]
    r = r_ref[...]

    denom = r0 + k_eff * x
    inv = 1.0 / denom            # exact divide: result is squared, need 1e-5 accuracy
    inv2 = inv * inv

    down = c_down * inv2
    fx = -(r * r) * r_sq_scale * inv2

    # power_approx: 1 + sum_{i=1..degree} fx^i / i!, evaluated via Horner.
    coeffs = [1.0 / math.factorial(i) for i in range(degree, 0, -1)]
    poly = jnp.full_like(fx, coeffs[0])
    for c in coeffs[1:]:
        poly = poly * fx + c
    poly = poly * fx + 1.0

    out_ref[...] = jnp.maximum(down * poly, 0.0)  # final relu


def physics_induced_attention(xs, alpha, r0, k, norm_std, norm_w, degree=5):
    """xs: (N, 3) float32. Returns (N, 1) float32, matching the PyTorch module (eval mode)."""
    N, F = xs.shape
    assert F == 3, "input_dim must be 3"

    # ---- fold all scalar work into 4 SMEM scalars --------------------------------
    eps = 1e-10
    scale = (jnp.maximum(norm_w, 0.0) / norm_std).astype(jnp.float32)  # relu(w)/std
    alpha_e = jnp.maximum(jnp.asarray(alpha, jnp.float32) + eps, 0.0).reshape(())
    r0_e = jnp.maximum(jnp.asarray(r0, jnp.float32) + eps, 0.0).reshape(())
    k_e = jnp.maximum(jnp.asarray(k, jnp.float32) + eps, 0.0).reshape(())
    k_eff = k_e * scale[0]
    c_down = alpha_e * r0_e * r0_e
    r_sq_scale = scale[1] * scale[1]
    params = jnp.stack([r0_e, k_eff, c_down, r_sq_scale]).astype(jnp.float32)  # (4,)

    # ---- lane/sublane-dense relayout: two (rows, 128) slabs, ws column dropped ----
    rows = pl.cdiv(N, LANE)
    if rows <= MAX_TILE_ROWS:
        tile_r = rows
        padded_rows = rows
    else:
        tile_r = MAX_TILE_ROWS
        padded_rows = pl.cdiv(rows, tile_r) * tile_r
    n_pad = padded_rows * LANE

    x_col = xs[:, 0].astype(jnp.float32)
    r_col = xs[:, 1].astype(jnp.float32)
    # feature 2 (ws) is never read by get_scaled_bias -> never DMA'd
    if n_pad != N:
        # pad with 0: denom = r0 > 0 on padded lanes, results sliced off below
        x_col = jnp.pad(x_col, (0, n_pad - N))
        r_col = jnp.pad(r_col, (0, n_pad - N))
    x_slab = x_col.reshape(padded_rows, LANE)
    r_slab = r_col.reshape(padded_rows, LANE)
    # TODO(synk): producing xs already as per-feature (rows, 128) slabs upstream would
    # remove this wrapper-side relayout pass entirely.

    grid = (padded_rows // tile_r,)

    out = pl.pallas_call(
        partial(_phys_attn_kernel, degree=degree),
        out_shape=jax.ShapeDtypeStruct((padded_rows, LANE), jnp.float32),
        grid_spec=pltpu.PrefetchScalarGridSpec(
            num_scalar_prefetch=1,  # params -> SMEM, passed positionally to index_maps
            grid=grid,
            in_specs=[
                pl.BlockSpec((tile_r, LANE), lambda i, p: (i, 0)),
                pl.BlockSpec((tile_r, LANE), lambda i, p: (i, 0)),
            ],
            out_specs=pl.BlockSpec((tile_r, LANE), lambda i, p: (i, 0)),
        ),
        compiler_params=pltpu.CompilerParams(
            dimension_semantics=("parallel",),
        ),
    )(params, x_slab, r_slab)

    return out.reshape(-1)[:N].reshape(N, 1)


def _reference(xs, alpha, r0, k, norm_std, norm_w, degree=5):
    """Pure-JAX reference mirroring the PyTorch forward (eval mode)."""
    eps = 1e-10
    xs = xs / norm_std * jnp.maximum(norm_w, 0.0)
    x, r = xs[:, 0:1], xs[:, 1:2]
    r0 = jnp.maximum(r0 + eps, 0.0)
    alpha = jnp.maximum(alpha + eps, 0.0)
    k = jnp.maximum(k + eps, 0.0)
    denom = r0 + k * x
    down = alpha * (r0 / denom) ** 2
    fx = -((r / denom) ** 2)
    ret = jnp.ones_like(fx)
    fact = 1.0
    for i in range(1, degree + 1):
        fact *= i
        ret = ret + fx ** i / fact
    return jnp.maximum(down * ret, 0.0)


if __name__ == "__main__":
    key = jax.random.PRNGKey(0)
    N, F = 256, 3
    xs = jax.random.normal(key, (N, F), dtype=jnp.float32)

    # Deterministic parameter init exactly as in the module __init__ / reset_stats:
    alpha = jnp.ones((1,), jnp.float32)     # self.alpha.data.fill_(1.0)
    r0 = jnp.ones((1,), jnp.float32)        # self.r0.data.fill_(1.0)
    k = jnp.ones((1,), jnp.float32)         # self.k.data.fill_(1.0)
    norm_std = jnp.ones((F,), jnp.float32)  # Normalizer.reset_stats -> std = 1
    norm_w = jnp.ones((F,), jnp.float32)    # Normalizer.w init = ones

    out = physics_induced_attention(xs, alpha, r0, k, norm_std, norm_w, degree=5)
    out = jax.block_until_ready(out)

    ref = _reference(xs, alpha, r0, k, norm_std, norm_w, degree=5)
    assert out.shape == (N, 1)
    assert jnp.allclose(out, ref, atol=1e-5, rtol=1e-5), (
        float(jnp.max(jnp.abs(out - ref)))
    )

    print("KERNEL_OK")
</pallas_src>

<mosaic_0001>
module attributes {stable_mosaic.version = 11 : i64} {
  func.func @_phys_attn_kernel(%arg0: i32, %arg1: memref<4xf32, #tpu.memory_space<smem>>, %arg2: memref<2x128xf32, #tpu.memory_space<vmem>>, %arg3: memref<2x128xf32, #tpu.memory_space<vmem>>, %arg4: memref<2x128xf32, #tpu.memory_space<vmem>>) attributes {dimension_semantics = [#tpu.dimension_semantics<parallel>], iteration_bounds = array<i64: 1>, scalar_prefetch = 1 : i64, scratch_operands = 0 : i64, tpu.core_type = #tpu.core_type<tc>, window_params = [{transform_indices = @transform_0, window_bounds = array<i64: 2, 128>}, {transform_indices = @transform_1, window_bounds = array<i64: 2, 128>}, {transform_indices = @transform_2, window_bounds = array<i64: 2, 128>}]} {
    %c0 = arith.constant 0 : index
    %0 = memref.load %arg1[%c0] : memref<4xf32, #tpu.memory_space<smem>>
    %c1 = arith.constant 1 : index
    %1 = memref.load %arg1[%c1] : memref<4xf32, #tpu.memory_space<smem>>
    %c2 = arith.constant 2 : index
    %2 = memref.load %arg1[%c2] : memref<4xf32, #tpu.memory_space<smem>>
    %c3 = arith.constant 3 : index
    %3 = memref.load %arg1[%c3] : memref<4xf32, #tpu.memory_space<smem>>
    %c0_0 = arith.constant 0 : index
    %c0_1 = arith.constant 0 : index
    %4 = vector.load %arg2[%c0_0, %c0_1] : memref<2x128xf32, #tpu.memory_space<vmem>>, vector<2x128xf32>
    %c0_2 = arith.constant 0 : index
    %c0_3 = arith.constant 0 : index
    %5 = vector.load %arg3[%c0_2, %c0_3] : memref<2x128xf32, #tpu.memory_space<vmem>>, vector<2x128xf32>
    %6 = vector.broadcast %1 : f32 to vector<2x128xf32>
    %7 = arith.mulf %6, %4 : vector<2x128xf32>
    %8 = vector.broadcast %0 : f32 to vector<2x128xf32>
    %9 = arith.addf %8, %7 : vector<2x128xf32>
    %cst = arith.constant 1.000000e+00 : f32
    %10 = vector.broadcast %cst : f32 to vector<2x128xf32>
    %11 = arith.divf %10, %9 : vector<2x128xf32>
    %12 = arith.mulf %11, %11 : vector<2x128xf32>
    %13 = vector.broadcast %2 : f32 to vector<2x128xf32>
    %14 = arith.mulf %13, %12 : vector<2x128xf32>
    %15 = arith.mulf %5, %5 : vector<2x128xf32>
    %cst_4 = arith.constant 0.000000e+00 : f32
    %16 = vector.broadcast %cst_4 : f32 to vector<2x128xf32>
    %17 = arith.subf %16, %15 : vector<2x128xf32>
    %18 = vector.broadcast %3 : f32 to vector<2x128xf32>
    %19 = arith.mulf %17, %18 : vector<2x128xf32>
    %20 = arith.mulf %19, %12 : vector<2x128xf32>
    %cst_5 = arith.constant 0.00833333377 : f32
    %21 = vector.broadcast %cst_5 : f32 to vector<2x128xf32>
    %22 = arith.mulf %21, %20 : vector<2x128xf32>
    %cst_6 = arith.constant 0.0416666679 : f32
    %23 = vector.broadcast %cst_6 : f32 to vector<2x128xf32>
    %24 = arith.addf %22, %23 : vector<2x128xf32>
    %25 = arith.mulf %24, %20 : vector<2x128xf32>
    %cst_7 = arith.constant 0.166666672 : f32
    %26 = vector.broadcast %cst_7 : f32 to vector<2x128xf32>
    %27 = arith.addf %25, %26 : vector<2x128xf32>
    %28 = arith.mulf %27, %20 : vector<2x128xf32>
    %cst_8 = arith.constant 5.000000e-01 : f32
    %29 = vector.broadcast %cst_8 : f32 to vector<2x128xf32>
    %30 = arith.addf %28, %29 : vector<2x128xf32>
    %31 = arith.mulf %30, %20 : vector<2x128xf32>
    %cst_9 = arith.constant 1.000000e+00 : f32
    %32 = vector.broadcast %cst_9 : f32 to vector<2x128xf32>
    %33 = arith.addf %31, %32 : vector<2x128xf32>
    %34 = arith.mulf %33, %20 : vector<2x128xf32>
    %cst_10 = arith.constant 1.000000e+00 : f32
    %35 = vector.broadcast %cst_10 : f32 to vector<2x128xf32>
    %36 = arith.addf %34, %35 : vector<2x128xf32>
    %37 = arith.mulf %14, %36 : vector<2x128xf32>
    %cst_11 = arith.constant 0.000000e+00 : f32
    %38 = vector.broadcast %cst_11 : f32 to vector<2x128xf32>
    %39 = arith.maximumf %37, %38 : vector<2x128xf32>
    %c0_12 = arith.constant 0 : index
    %c0_13 = arith.constant 0 : index
    %40 = vector.load %arg4[%c0_12, %c0_13] : memref<2x128xf32, #tpu.memory_space<vmem>>, vector<2x128xf32>
    tpu.vector_store %arg4[%c0_12, %c0_13], %39 {strides = array<i32>} : memref<2x128xf32, #tpu.memory_space<vmem>>, vector<2x128xf32>,
    return
  }
  func.func @transform_0(%arg0: i32, %arg1: memref<4xf32, #tpu.memory_space<smem>>) -> (i32, i32) {
    %c0_i32 = arith.constant 0 : i32
    %c0_i32_0 = arith.constant 0 : i32
    return %arg0, %c0_i32 : i32, i32
  }
  func.func @transform_1(%arg0: i32, %arg1: memref<4xf32, #tpu.memory_space<smem>>) -> (i32, i32) {
    %c0_i32 = arith.constant 0 : i32
    %c0_i32_0 = arith.constant 0 : i32
    return %arg0, %c0_i32 : i32, i32
  }
  func.func @transform_2(%arg0: i32, %arg1: memref<4xf32, #tpu.memory_space<smem>>) -> (i32, i32) {
    %c0_i32 = arith.constant 0 : i32
    %c0_i32_0 = arith.constant 0 : i32
    return %arg0, %c0_i32 : i32, i32
  }
}

</mosaic_0001>

<llo_original>
// kernel: tpu_custom_call.1
$region0: #{tpu_custom_call.1}
  #allocation0 [shape = 'u32[]', space=smem, size = 0x4, offset = 0x4, fixed_abs, tag = 'smem constant byte address 0x4 - core index']
  #allocation1 [shape = 'u32[72,128]{1,0:T(1,128)}', space=vmem, size = 0x9000, scoped, tag = 'internal scratch']
  #allocation2 [shape = 's32[1]{0}', space=sflag, size = 0x4, scoped, tag = 'scoped memory for tpu_custom_call.1']
  #allocation3 [shape = 'u8[512]{0}', space=smem, size = 0x200, scoped, tag = 'prefetched SMEM operand 0']
  %s0 = inlined_call_operand.hbm [shape: f32[4], index: 0, kind: input, shape index: {}]
  %s1 = inlined_call_operand.hbm [shape: f32[2,128], index: 1, kind: input, shape index: {}]
  %s2 = inlined_call_operand.hbm [shape: f32[2,128], index: 2, kind: input, shape index: {}]
  %s3 = inlined_call_operand.hbm [shape: f32[2,128], index: 3, kind: output, shape index: {}]
  %s4 = sld [smem:[#allocation0]]
  $region26: #{tpu_custom_call.1} parent=0
    _
  %s6 = ssub.s32 1, %s4
  %s7 = scalar_select 0, %s6, %s4
  %s9 = sshll.u32 %s0, 4
  %s10 = int_to_ptr.hbm [resolvable:$true] %s9
  %12 = dma.hbm_to_smem %s10, 16, [#allocation3], [#allocation2]
  %14 = dma.done [#allocation2], 16
  %15 = sfence
  $region1: #{tpu_custom_call.1} parent=0
    #allocation4 [shape = 'u8[1024]{0}', space=vmem, size = 0x400, scoped, tag = 'input window, operand 1, single buffered']
    #allocation5 [shape = 's32[1]{0}', space=sflag, size = 0x4, scoped, tag = 'scoped memory for tpu_custom_call.1']
    #allocation6 [shape = 's32[1]{0}', space=sflag, size = 0x4, scoped, tag = 'scoped memory for tpu_custom_call.1']
    #allocation7 [shape = 'u8[1024]{0}', space=vmem, size = 0x400, scoped, tag = 'input window, operand 2, single buffered']
    #allocation8 [shape = 's32[1]{0}', space=sflag, size = 0x4, scoped, tag = 'scoped memory for tpu_custom_call.1']
    #allocation9 [shape = 'u8[1024]{0}', space=vmem, size = 0x400, scoped, tag = 'output window, operand 0, single buffered']
    %16 = vsyncpa [#allocation5], 0
    %17 = vsyncpa [#allocation8], 0
    %18 = vsyncpa [#allocation6], 0
    // Predicated region
    $region2: #{tpu_custom_call.1} parent=1 // pred_check
      _
    $region3: #{tpu_custom_call.1} parent=1 // pred_check_branch
      %20 = sbr.rel (0) target = $region5
    $region4: #{tpu_custom_call.1} parent=1 // pred_region
      %22 = vsyncadd [#allocation5], 0
      %s24 = sshll.u32 %s1, 4
      %s25 = int_to_ptr.hbm [resolvable:$true] %s24
      %s26 = sshll.u32 [#allocation4], 4
      %s27 = int_to_ptr.vmem [resolvable:$true] %s26
      %29 = dma.hbm_to_vmem [thread:$0]  %s25, 32, %s27, [#allocation5]
    $region5: #{tpu_custom_call.1} parent=1 // pred_fallthru
      _
    // Predicated region
    $region6: #{tpu_custom_call.1} parent=1 // pred_check
      _
    $region7: #{tpu_custom_call.1} parent=1 // pred_check_branch
      %31 = sbr.rel (0) target = $region9
    $region8: #{tpu_custom_call.1} parent=1 // pred_region
      %33 = vsyncadd [#allocation8], 0
      %s35 = sshll.u32 %s2, 4
      %s36 = int_to_ptr.hbm [resolvable:$true] %s35
      %s37 = sshll.u32 [#allocation7], 4
      %s38 = int_to_ptr.vmem [resolvable:$true] %s37
      %40 = dma.hbm_to_vmem [thread:$0]  %s36, 32, %s38, [#allocation8]
    $region9: #{tpu_custom_call.1} parent=1 // pred_fallthru
      _
    // Predicated region
    $region10: #{tpu_custom_call.1} parent=1 // pred_check
      _
    $region11: #{tpu_custom_call.1} parent=1 // pred_check_branch
      %42 = sbr.rel (0) target = $region13
    $region12: #{tpu_custom_call.1} parent=1 // pred_region
      %44 = dma.done [#allocation5], 32
    $region13: #{tpu_custom_call.1} parent=1 // pred_fallthru
      _
    // Predicated region
    $region14: #{tpu_custom_call.1} parent=1 // pred_check
      _
    $region15: #{tpu_custom_call.1} parent=1 // pred_check_branch
      %46 = sbr.rel (0) target = $region17
    $region16: #{tpu_custom_call.1} parent=1 // pred_region
      %48 = dma.done [#allocation8], 32
    $region17: #{tpu_custom_call.1} parent=1 // pred_fallthru
      _
    %s49 = sld [smem:[#allocation3]]
    %s50 = sld [smem:[#allocation3 + $0x1]]
    %s51 = sld [smem:[#allocation3 + $0x2]]
    %s52 = sld [smem:[#allocation3 + $0x3]]
    %v53 = vld [vmem:[#allocation4] sm:$0x3]
    %v54 = vld [vmem:[#allocation7] sm:$0x3]
    %v55 = vstv %s50
    %v56 = vmul.f32 %v55, %v53
    %v57 = vstv %s49
    %v58 = vadd.f32 %v57, %v56
    %v59 = vrcp.pop %v58
    %v60 = vmul.f32 %v58, %v59
    %v61 = vsub.f32 1.0, %v60
    %v62 = vmul.f32 %v59, %v61
    %v63 = vadd.f32 %v59, %v62
    %vm64 = vweird.f32 %v58
    %vm65 = vweird.f32 %v59
    %vm66 = vmor %vm64, %vm65
    %v67 = vsel %vm66, %v59, %v63
    %v68 = vand.u32 2147483647, %v58
    %vm69 = vcmp.eq.f32.partialorder %v68, 8.507059e+37
    %v70 = vand.u32 %v58, 2147483648
    %v71 = vor.u32 1.1754944e-38, %v70
    %v72 = vsel %vm69, %v71, %v67
    %v73 = vmul.f32 1.0, %v72
    %v74 = vmul.f32 %v73, %v73
    %v75 = vstv %s51
    %v76 = vmul.f32 %v75, %v74
    %v77 = vmul.f32 %v54, %v54
    %v78 = vsub.f32 0.0, %v77
    %v79 = vstv %s52
    %v80 = vmul.f32 %v78, %v79
    %v81 = vmul.f32 %v80, %v74
    %v82 = vmul.f32 %v81, 0.008333334
    %v83 = vadd.f32 %v82, 0.041666668
    %v84 = vmul.f32 %v83, %v81
    %v85 = vadd.f32 %v84, 0.16666667
    %v86 = vmul.f32 %v85, %v81
    %v87 = vadd.f32 %v86, 0.5
    %v88 = vmul.f32 %v87, %v81
    %v89 = vadd.f32 %v88, 1.0
    %v90 = vmul.f32 %v89, %v81
    %v91 = vadd.f32 %v90, 1.0
    %v92 = vmul.f32 %v76, %v91
    %v93 = vmax.f32 %v92, 0.0
    %94 = vst [vmem:[#allocation9] sm:$0x3] %v93
    // Predicated region
    $region18: #{tpu_custom_call.1} parent=1 // pred_check
      _
    $region19: #{tpu_custom_call.1} parent=1 // pred_check_branch
      %96 = sbr.rel (0) target = $region21
    $region20: #{tpu_custom_call.1} parent=1 // pred_region
      %98 = vsyncadd [#allocation6], 0
      %s100 = sshll.u32 [#allocation9], 4
      %s101 = int_to_ptr.vmem [resolvable:$true] %s100
      %s102 = sshll.u32 %s3, 4
      %s103 = int_to_ptr.hbm [resolvable:$true] %s102
      %105 = dma.vmem_to_hbm [thread:$0]  %s101, 32, %s103, [#allocation6]
    $region21: #{tpu_custom_call.1} parent=1 // pred_fallthru
      _
    // Predicated region
    $region22: #{tpu_custom_call.1} parent=1 // pred_check
      _
    $region23: #{tpu_custom_call.1} parent=1 // pred_check_branch
      %107 = sbr.rel (0) target = $region25
    $region24: #{tpu_custom_call.1} parent=1 // pred_region
      %109 = dma.done [#allocation6], 32
    $region25: #{tpu_custom_call.1} parent=1 // pred_fallthru
      _
    %110 = vsyncpa [#allocation5], 1
    %111 = vsyncpa [#allocation8], 1
    %112 = vsyncpa [#allocation6], 1

</llo_original>
